<compile_context>
chip_gen: v5e
topology: v5e:2x2
jax: 0.10.0
libtpu: 0.0.40
codegen_flags: <defaults>
</compile_context>

<pallas_src>
import functools

import jax
import jax.numpy as jnp
from jax.experimental import pallas as pl
from jax.experimental.pallas import tpu as pltpu


def _outconv2d_kernel(x_ref, w_ref, b_ref, o_ref, xpad_ref, *,
                      width, pad, bt, cin, ncls):
    # x_ref:    (1, Bt*Cin, H*W)        VMEM  flattened-spatial input slab
    # w_ref:    (Bt*Cin, 9*Ncls)        VMEM  folded weights, [c_row, tap*Ncls+n]
    # b_ref:    (Ncls,)                 SMEM  folded bias
    # o_ref:    (1, Bt*Ncls, H*W)       VMEM  lane-dense output slab
    # xpad_ref: (Bt*Cin, pad+H*W+pad)   VMEM  scratch with zero halo on both sides
    hw = x_ref.shape[2]
    bc = bt * cin

    # Zero only the halo strips (centre is fully overwritten on the next line).
    # NOTE: must run every step (no program_id==0 guard) so it stays correct
    # under megacore 'parallel' sharding.
    xpad_ref[:, :pad] = jnp.zeros((bc, pad), jnp.float32)
    xpad_ref[:, pad + hw:] = jnp.zeros((bc, pad), jnp.float32)
    xpad_ref[:, pad:pad + hw] = x_ref[0].astype(jnp.float32)

    # Column-validity masks (a shifted column would wrap into the neighbouring
    # row in the flattened layout).  Broadcasts hoisted; reused by 3 taps each.
    col = jax.lax.broadcasted_iota(jnp.int32, (1, hw), 1) % width
    valid_left = jnp.broadcast_to(col >= 1, (bc, hw))           # kx == 0 (dx = -1)
    valid_right = jnp.broadcast_to(col <= width - 2, (bc, hw))  # kx == 2 (dx = +1)

    # Folded weights staged once per step; static lane slices per (tap, class).
    w_all = w_ref[...]                                           # (bc, 9*ncls)
    w_cols = [[w_all[:, (tap * ncls + n):(tap * ncls + n) + 1]   # (bc, 1)
               for n in range(ncls)] for tap in range(9)]

    # Per-class accumulators over the full (bc, hw) slab (sublane-dense FMAs).
    acc = [jnp.zeros((bc, hw), jnp.float32) for _ in range(ncls)]

    for ky in range(3):
        for kx in range(3):
            off = (ky - 1) * width + (kx - 1)
            start = pad + off
            patch = xpad_ref[:, start:start + hw]                # (bc, hw) window
            if kx == 0:
                patch = jnp.where(valid_left, patch, 0.0)
            elif kx == 2:
                patch = jnp.where(valid_right, patch, 0.0)
            tap = ky * 3 + kx
            for n in range(ncls):
                acc[n] = acc[n] + w_cols[tap][n] * patch         # VPU FMA (lane-bcast w)

    # Cross-sublane reduce per (image, class) on the XLU, add bias, store
    # each class row directly (lane-dense, no concatenate/relayout).
    for b in range(bt):
        for n in range(ncls):
            red = jnp.sum(acc[n][b * cin:(b + 1) * cin, :], axis=0,
                          keepdims=True)                          # (1, hw)
            row = b * ncls + n
            o_ref[0, row:row + 1, :] = (red + b_ref[n]).astype(o_ref.dtype)


def fold_outconv2d_params(w1_oihw, b1, w2_oihw, b2):
    """Fold the 1x1 conv into the 3x3 conv (exact: both linear).

    Call once at parameter-prep time, NOT per forward.
    Returns (w_folded (C, 9*Ncls), b_folded (Ncls,)), both f32,
    with w_folded[c, tap*Ncls + n] = w_eff[ky, kx, c, n], tap = ky*3+kx.
    """
    C = w1_oihw.shape[1]
    ncls = w2_oihw.shape[0]
    w2m = w2_oihw[:, :, 0, 0]                                   # (Ncls, Cmid)
    w_eff = jnp.einsum('nm,mchw->hwcn', w2m, w1_oihw)           # (3, 3, C, Ncls)
    w_folded = (w_eff.reshape(9, C, ncls).transpose(1, 0, 2)
                .reshape(C, 9 * ncls).astype(jnp.float32))
    b_folded = (w2m @ b1 + b2).astype(jnp.float32)
    return w_folded, b_folded


def _pick_batch_tile(B, C, HW, itemsize, target_bytes=512 * 1024):
    """Images per grid step: aim for ~512 KiB per step, but keep >=2 grid steps
    (megacore 'parallel' sharding on v7x) when the batch allows."""
    per_image = max(1, C * HW * itemsize)
    want = max(1, target_bytes // per_image)
    bt = int(min(want, max(1, B // 2)))
    bt = max(1, bt)
    while B % bt:
        bt -= 1
    return bt


def outconv2d_apply(x_nchw, w_folded, b_folded):
    """Apply the fused OutConv2d with pre-folded params. x: (B, C, H, W)."""
    B, C, H, W = x_nchw.shape
    ncls = b_folded.shape[0]
    HW = H * W

    bt = _pick_batch_tile(B, C, HW, jnp.dtype(x_nchw.dtype).itemsize)
    G = B // bt
    pad = 128 * pl.cdiv(W + 1, 128)     # lane-aligned halo, >= W+1 zeros per side

    # Free, contiguous reshape only -- no transpose / pad passes over HBM.
    x_g = x_nchw.reshape(G, bt * C, HW)
    # Tiny (108-element) tile of the pre-folded weights to match the slab rows.
    w_vmem = jnp.tile(w_folded, (bt, 1))                        # (bt*C, 9*ncls)

    kernel = functools.partial(_outconv2d_kernel, width=W, pad=pad,
                               bt=bt, cin=C, ncls=ncls)

    out_g = pl.pallas_call(
        kernel,
        out_shape=jax.ShapeDtypeStruct((G, bt * ncls, HW), x_nchw.dtype),
        grid_spec=pltpu.PrefetchScalarGridSpec(
            num_scalar_prefetch=0,
            grid=(G,),
            in_specs=[
                pl.BlockSpec((1, bt * C, HW), lambda g: (g, 0, 0)),
                pl.BlockSpec((bt * C, 9 * ncls), lambda g: (0, 0)),   # resident weights
                pl.BlockSpec(memory_space=pltpu.MemorySpace.SMEM),    # folded bias
            ],
            out_specs=pl.BlockSpec((1, bt * ncls, HW), lambda g: (g, 0, 0)),
            scratch_shapes=[pltpu.VMEM((bt * C, pad + HW + pad), jnp.float32)],
        ),
        compiler_params=pltpu.CompilerParams(
            dimension_semantics=("parallel",),
            vmem_limit_bytes=48 * 1024 * 1024),
    )(x_g, w_vmem, b_folded)

    # TODO(synk): for production-size feature maps add a row-block grid axis with
    # a halo (block = 2x in + 2x out + (bt*C, 2*pad + rows*W) scratch, kept under
    # ~48 MiB for v7x's 64 MiB VMEM and ~12 MiB for v5e's 16 MiB scoped default),
    # and optionally DMA straight into xpad via memory_space=pl.ANY.
    return out_g.reshape(B, ncls, H, W)                          # free reshape to NCHW


def outconv2d_forward(x_nchw, w1_oihw, b1, w2_oihw, b2):
    """Convenience wrapper: fold params + apply (fold should be hoisted to
    parameter-prep time in production)."""
    w_folded, b_folded = fold_outconv2d_params(w1_oihw, b1, w2_oihw, b2)
    return outconv2d_apply(x_nchw, w_folded, b_folded)


def _reference_forward(x_nchw, w1_oihw, b1, w2_oihw, b2):
    """Pure-JAX reference (lax conv) for correctness checking."""
    y = jax.lax.conv_general_dilated(
        x_nchw, w1_oihw, window_strides=(1, 1), padding=((1, 1), (1, 1)),
        dimension_numbers=("NCHW", "OIHW", "NCHW"))
    y = y + b1[None, :, None, None]
    z = jax.lax.conv_general_dilated(
        y, w2_oihw, window_strides=(1, 1), padding="VALID",
        dimension_numbers=("NCHW", "OIHW", "NCHW"))
    return z + b2[None, :, None, None]


if __name__ == "__main__":
    # Small shapes consistent with the module: channels=4 -> mid=2, n_class=3.
    B, C, H, W = 2, 4, 16, 16
    Cmid = C // 2
    n_class = 3

    key = jax.random.PRNGKey(0)
    kx, k1, kb1, k2, kb2 = jax.random.split(key, 5)

    x = jax.random.normal(kx, (B, C, H, W), dtype=jnp.float32)
    # Parameter shapes mirror nn.Conv2d (OIHW weights + per-out-channel bias).
    w1 = jax.random.normal(k1, (Cmid, C, 3, 3), dtype=jnp.float32) * 0.1
    b1 = jax.random.normal(kb1, (Cmid,), dtype=jnp.float32) * 0.1
    w2 = jax.random.normal(k2, (n_class, Cmid, 1, 1), dtype=jnp.float32) * 0.1
    b2 = jax.random.normal(kb2, (n_class,), dtype=jnp.float32) * 0.1

    out = jax.block_until_ready(outconv2d_forward(x, w1, b1, w2, b2))
    ref = jax.block_until_ready(_reference_forward(x, w1, b1, w2, b2))

    assert out.shape == (B, n_class, H, W), out.shape
    assert jnp.allclose(out, ref, atol=1e-4, rtol=1e-4), "mismatch vs reference"

    print("KERNEL_OK")
</pallas_src>

<mosaic_0001>
module attributes {stable_mosaic.version = 11 : i64} {
  func.func @_outconv2d_kernel(%arg0: i32, %arg1: memref<1x4x256xf32, #tpu.memory_space<vmem>>, %arg2: memref<4x27xf32, #tpu.memory_space<vmem>>, %arg3: memref<3xf32, #tpu.memory_space<smem>>, %arg4: memref<1x3x256xf32, #tpu.memory_space<vmem>>, %arg5: memref<4x512xf32, #tpu.memory_space<vmem>>) attributes {dimension_semantics = [#tpu.dimension_semantics<parallel>], iteration_bounds = array<i64: 2>, scalar_prefetch = 0 : i64, scratch_operands = 1 : i64, tpu.core_type = #tpu.core_type<tc>, window_params = [{transform_indices = @transform_0, window_bounds = array<i64: 1, 4, 256>}, {pipeline_mode = #tpu.pipeline_mode<synchronous>, transform_indices = @transform_1, window_bounds = array<i64: 4, 27>}, {transform_indices = @transform_2, window_bounds = array<i64: 3>}, {transform_indices = @transform_3, window_bounds = array<i64: 1, 3, 256>}]} {
    %cst = arith.constant 0.000000e+00 : f32
    %0 = vector.broadcast %cst : f32 to vector<4x128xf32>
    %c0 = arith.constant 0 : index
    %c0_0 = arith.constant 0 : index
    %1 = vector.load %arg5[%c0, %c0_0] : memref<4x512xf32, #tpu.memory_space<vmem>>, vector<4x128xf32>
    tpu.vector_store %arg5[%c0, %c0_0], %0 {strides = array<i32>} : memref<4x512xf32, #tpu.memory_space<vmem>>, vector<4x128xf32>,
    %cst_1 = arith.constant 0.000000e+00 : f32
    %2 = vector.broadcast %cst_1 : f32 to vector<4x128xf32>
    %c0_2 = arith.constant 0 : index
    %c384 = arith.constant 384 : index
    %3 = vector.load %arg5[%c0_2, %c384] : memref<4x512xf32, #tpu.memory_space<vmem>>, vector<4x128xf32>
    tpu.vector_store %arg5[%c0_2, %c384], %2 {strides = array<i32>} : memref<4x512xf32, #tpu.memory_space<vmem>>, vector<4x128xf32>,
    %c0_3 = arith.constant 0 : index
    %c0_4 = arith.constant 0 : index
    %c0_5 = arith.constant 0 : index
    %4 = vector.load %arg1[%c0_3, %c0_4, %c0_5] : memref<1x4x256xf32, #tpu.memory_space<vmem>>, vector<1x4x256xf32>
    %5 = vector.shape_cast %4 : vector<1x4x256xf32> to vector<4x256xf32>
    %c0_6 = arith.constant 0 : index
    %c128 = arith.constant 128 : index
    %6 = vector.load %arg5[%c0_6, %c128] : memref<4x512xf32, #tpu.memory_space<vmem>>, vector<4x256xf32>
    tpu.vector_store %arg5[%c0_6, %c128], %5 {strides = array<i32>} : memref<4x512xf32, #tpu.memory_space<vmem>>, vector<4x256xf32>,
    %7 = tpu.iota {dimensions = array<i32: 1>} : vector<1x256xi32>
    %c16_i32 = arith.constant 16 : i32
    %c0_i32 = arith.constant 0 : i32
    %8 = arith.cmpi eq, %c16_i32, %c0_i32 : i32
    %c1_i32 = arith.constant 1 : i32
    %9 = arith.select %8, %c1_i32, %c16_i32 : i32
    %10 = vector.broadcast %9 : i32 to vector<1x256xi32>
    %11 = arith.remsi %7, %10 : vector<1x256xi32>
    %c0_i32_7 = arith.constant 0 : i32
    %12 = vector.broadcast %c0_i32_7 : i32 to vector<1x256xi32>
    %13 = arith.cmpi ne, %11, %12 : vector<1x256xi32>
    %c0_i32_8 = arith.constant 0 : i32
    %14 = vector.broadcast %c0_i32_8 : i32 to vector<1x256xi32>
    %15 = arith.cmpi slt, %11, %14 : vector<1x256xi32>
    %c0_i32_9 = arith.constant 0 : i32
    %16 = arith.cmpi slt, %9, %c0_i32_9 : i32
    %17 = vector.broadcast %16 : i1 to vector<1x256xi1>
    %18 = vector.broadcast %17 : vector<1x256xi1> to vector<1x256xi1>
    %19 = arith.xori %15, %18 : vector<1x256xi1>
    %20 = arith.andi %19, %13 : vector<1x256xi1>
    %21 = vector.broadcast %9 : i32 to vector<1x256xi32>
    %22 = arith.addi %11, %21 : vector<1x256xi32>
    %23 = arith.select %20, %22, %11 : vector<1x256xi1>, vector<1x256xi32>
    %c1_i32_10 = arith.constant 1 : i32
    %24 = vector.broadcast %c1_i32_10 : i32 to vector<1x256xi32>
    %25 = arith.cmpi sge, %23, %24 : vector<1x256xi32>
    %26 = vector.shape_cast %25 : vector<1x256xi1> to vector<1x256xi1>
    %27 = vector.broadcast %26 : vector<1x256xi1> to vector<4x256xi1>
    %c14_i32 = arith.constant 14 : i32
    %28 = vector.broadcast %c14_i32 : i32 to vector<1x256xi32>
    %29 = arith.cmpi sle, %23, %28 : vector<1x256xi32>
    %30 = vector.shape_cast %29 : vector<1x256xi1> to vector<1x256xi1>
    %31 = vector.broadcast %30 : vector<1x256xi1> to vector<4x256xi1>
    %c0_11 = arith.constant 0 : index
    %c0_12 = arith.constant 0 : index
    %32 = vector.load %arg2[%c0_11, %c0_12] : memref<4x27xf32, #tpu.memory_space<vmem>>, vector<4x27xf32>
    %33 = vector.extract_strided_slice %32 {offsets = [0, 0], sizes = [4, 1], strides = [1, 1]} : vector<4x27xf32> to vector<4x1xf32>
    %34 = vector.extract_strided_slice %32 {offsets = [0, 1], sizes = [4, 1], strides = [1, 1]} : vector<4x27xf32> to vector<4x1xf32>
    %35 = vector.extract_strided_slice %32 {offsets = [0, 2], sizes = [4, 1], strides = [1, 1]} : vector<4x27xf32> to vector<4x1xf32>
    %36 = vector.extract_strided_slice %32 {offsets = [0, 3], sizes = [4, 1], strides = [1, 1]} : vector<4x27xf32> to vector<4x1xf32>
    %37 = vector.extract_strided_slice %32 {offsets = [0, 4], sizes = [4, 1], strides = [1, 1]} : vector<4x27xf32> to vector<4x1xf32>
    %38 = vector.extract_strided_slice %32 {offsets = [0, 5], sizes = [4, 1], strides = [1, 1]} : vector<4x27xf32> to vector<4x1xf32>
    %39 = vector.extract_strided_slice %32 {offsets = [0, 6], sizes = [4, 1], strides = [1, 1]} : vector<4x27xf32> to vector<4x1xf32>
    %40 = vector.extract_strided_slice %32 {offsets = [0, 7], sizes = [4, 1], strides = [1, 1]} : vector<4x27xf32> to vector<4x1xf32>
    %41 = vector.extract_strided_slice %32 {offsets = [0, 8], sizes = [4, 1], strides = [1, 1]} : vector<4x27xf32> to vector<4x1xf32>
    %42 = vector.extract_strided_slice %32 {offsets = [0, 9], sizes = [4, 1], strides = [1, 1]} : vector<4x27xf32> to vector<4x1xf32>
    %43 = vector.extract_strided_slice %32 {offsets = [0, 10], sizes = [4, 1], strides = [1, 1]} : vector<4x27xf32> to vector<4x1xf32>
    %44 = vector.extract_strided_slice %32 {offsets = [0, 11], sizes = [4, 1], strides = [1, 1]} : vector<4x27xf32> to vector<4x1xf32>
    %45 = vector.extract_strided_slice %32 {offsets = [0, 12], sizes = [4, 1], strides = [1, 1]} : vector<4x27xf32> to vector<4x1xf32>
    %46 = vector.extract_strided_slice %32 {offsets = [0, 13], sizes = [4, 1], strides = [1, 1]} : vector<4x27xf32> to vector<4x1xf32>
    %47 = vector.extract_strided_slice %32 {offsets = [0, 14], sizes = [4, 1], strides = [1, 1]} : vector<4x27xf32> to vector<4x1xf32>
    %48 = vector.extract_strided_slice %32 {offsets = [0, 15], sizes = [4, 1], strides = [1, 1]} : vector<4x27xf32> to vector<4x1xf32>
    %49 = vector.extract_strided_slice %32 {offsets = [0, 16], sizes = [4, 1], strides = [1, 1]} : vector<4x27xf32> to vector<4x1xf32>
    %50 = vector.extract_strided_slice %32 {offsets = [0, 17], sizes = [4, 1], strides = [1, 1]} : vector<4x27xf32> to vector<4x1xf32>
    %51 = vector.extract_strided_slice %32 {offsets = [0, 18], sizes = [4, 1], strides = [1, 1]} : vector<4x27xf32> to vector<4x1xf32>
    %52 = vector.extract_strided_slice %32 {offsets = [0, 19], sizes = [4, 1], strides = [1, 1]} : vector<4x27xf32> to vector<4x1xf32>
    %53 = vector.extract_strided_slice %32 {offsets = [0, 20], sizes = [4, 1], strides = [1, 1]} : vector<4x27xf32> to vector<4x1xf32>
    %54 = vector.extract_strided_slice %32 {offsets = [0, 21], sizes = [4, 1], strides = [1, 1]} : vector<4x27xf32> to vector<4x1xf32>
    %55 = vector.extract_strided_slice %32 {offsets = [0, 22], sizes = [4, 1], strides = [1, 1]} : vector<4x27xf32> to vector<4x1xf32>
    %56 = vector.extract_strided_slice %32 {offsets = [0, 23], sizes = [4, 1], strides = [1, 1]} : vector<4x27xf32> to vector<4x1xf32>
    %57 = vector.extract_strided_slice %32 {offsets = [0, 24], sizes = [4, 1], strides = [1, 1]} : vector<4x27xf32> to vector<4x1xf32>
    %58 = vector.extract_strided_slice %32 {offsets = [0, 25], sizes = [4, 1], strides = [1, 1]} : vector<4x27xf32> to vector<4x1xf32>
    %59 = vector.extract_strided_slice %32 {offsets = [0, 26], sizes = [4, 1], strides = [1, 1]} : vector<4x27xf32> to vector<4x1xf32>
    %cst_13 = arith.constant 0.000000e+00 : f32
    %60 = vector.broadcast %cst_13 : f32 to vector<4x256xf32>
    %cst_14 = arith.constant 0.000000e+00 : f32
    %61 = vector.broadcast %cst_14 : f32 to vector<4x256xf32>
    %cst_15 = arith.constant 0.000000e+00 : f32
    %62 = vector.broadcast %cst_15 : f32 to vector<4x256xf32>
    %c0_16 = arith.constant 0 : index
    %c111 = arith.constant 111 : index
    %63 = vector.load %arg5[%c0_16, %c111] : memref<4x512xf32, #tpu.memory_space<vmem>>, vector<4x256xf32>
    %cst_17 = arith.constant 0.000000e+00 : f32
    %64 = vector.broadcast %cst_17 : f32 to vector<4x256xf32>
    %65 = arith.select %27, %63, %64 : vector<4x256xi1>, vector<4x256xf32>
    %66 = vector.broadcast %33 : vector<4x1xf32> to vector<4x256xf32>
    %67 = arith.mulf %66, %65 : vector<4x256xf32>
    %68 = arith.addf %60, %67 : vector<4x256xf32>
    %69 = vector.broadcast %34 : vector<4x1xf32> to vector<4x256xf32>
    %70 = arith.mulf %69, %65 : vector<4x256xf32>
    %71 = arith.addf %61, %70 : vector<4x256xf32>
    %72 = vector.broadcast %35 : vector<4x1xf32> to vector<4x256xf32>
    %73 = arith.mulf %72, %65 : vector<4x256xf32>
    %74 = arith.addf %62, %73 : vector<4x256xf32>
    %c0_18 = arith.constant 0 : index
    %c112 = arith.constant 112 : index
    %75 = vector.load %arg5[%c0_18, %c112] : memref<4x512xf32, #tpu.memory_space<vmem>>, vector<4x256xf32>
    %76 = vector.broadcast %36 : vector<4x1xf32> to vector<4x256xf32>
    %77 = arith.mulf %76, %75 : vector<4x256xf32>
    %78 = arith.addf %68, %77 : vector<4x256xf32>
    %79 = vector.broadcast %37 : vector<4x1xf32> to vector<4x256xf32>
    %80 = arith.mulf %79, %75 : vector<4x256xf32>
    %81 = arith.addf %71, %80 : vector<4x256xf32>
    %82 = vector.broadcast %38 : vector<4x1xf32> to vector<4x256xf32>
    %83 = arith.mulf %82, %75 : vector<4x256xf32>
    %84 = arith.addf %74, %83 : vector<4x256xf32>
    %c0_19 = arith.constant 0 : index
    %c113 = arith.constant 113 : index
    %85 = vector.load %arg5[%c0_19, %c113] : memref<4x512xf32, #tpu.memory_space<vmem>>, vector<4x256xf32>
    %cst_20 = arith.constant 0.000000e+00 : f32
    %86 = vector.broadcast %cst_20 : f32 to vector<4x256xf32>
    %87 = arith.select %31, %85, %86 : vector<4x256xi1>, vector<4x256xf32>
    %88 = vector.broadcast %39 : vector<4x1xf32> to vector<4x256xf32>
    %89 = arith.mulf %88, %87 : vector<4x256xf32>
    %90 = arith.addf %78, %89 : vector<4x256xf32>
    %91 = vector.broadcast %40 : vector<4x1xf32> to vector<4x256xf32>
    %92 = arith.mulf %91, %87 : vector<4x256xf32>
    %93 = arith.addf %81, %92 : vector<4x256xf32>
    %94 = vector.broadcast %41 : vector<4x1xf32> to vector<4x256xf32>
    %95 = arith.mulf %94, %87 : vector<4x256xf32>
    %96 = arith.addf %84, %95 : vector<4x256xf32>
    %c0_21 = arith.constant 0 : index
    %c127 = arith.constant 127 : index
    %97 = vector.load %arg5[%c0_21, %c127] : memref<4x512xf32, #tpu.memory_space<vmem>>, vector<4x256xf32>
    %cst_22 = arith.constant 0.000000e+00 : f32
    %98 = vector.broadcast %cst_22 : f32 to vector<4x256xf32>
    %99 = arith.select %27, %97, %98 : vector<4x256xi1>, vector<4x256xf32>
    %100 = vector.broadcast %42 : vector<4x1xf32> to vector<4x256xf32>
    %101 = arith.mulf %100, %99 : vector<4x256xf32>
    %102 = arith.addf %90, %101 : vector<4x256xf32>
    %103 = vector.broadcast %43 : vector<4x1xf32> to vector<4x256xf32>
    %104 = arith.mulf %103, %99 : vector<4x256xf32>
    %105 = arith.addf %93, %104 : vector<4x256xf32>
    %106 = vector.broadcast %44 : vector<4x1xf32> to vector<4x256xf32>
    %107 = arith.mulf %106, %99 : vector<4x256xf32>
    %108 = arith.addf %96, %107 : vector<4x256xf32>
    %c0_23 = arith.constant 0 : index
    %c128_24 = arith.constant 128 : index
    %109 = vector.load %arg5[%c0_23, %c128_24] : memref<4x512xf32, #tpu.memory_space<vmem>>, vector<4x256xf32>
    %110 = vector.broadcast %45 : vector<4x1xf32> to vector<4x256xf32>
    %111 = arith.mulf %110, %109 : vector<4x256xf32>
    %112 = arith.addf %102, %111 : vector<4x256xf32>
    %113 = vector.broadcast %46 : vector<4x1xf32> to vector<4x256xf32>
    %114 = arith.mulf %113, %109 : vector<4x256xf32>
    %115 = arith.addf %105, %114 : vector<4x256xf32>
    %116 = vector.broadcast %47 : vector<4x1xf32> to vector<4x256xf32>
    %117 = arith.mulf %116, %109 : vector<4x256xf32>
    %118 = arith.addf %108, %117 : vector<4x256xf32>
    %c0_25 = arith.constant 0 : index
    %c129 = arith.constant 129 : index
    %119 = vector.load %arg5[%c0_25, %c129] : memref<4x512xf32, #tpu.memory_space<vmem>>, vector<4x256xf32>
    %cst_26 = arith.constant 0.000000e+00 : f32
    %120 = vector.broadcast %cst_26 : f32 to vector<4x256xf32>
    %121 = arith.select %31, %119, %120 : vector<4x256xi1>, vector<4x256xf32>
    %122 = vector.broadcast %48 : vector<4x1xf32> to vector<4x256xf32>
    %123 = arith.mulf %122, %121 : vector<4x256xf32>
    %124 = arith.addf %112, %123 : vector<4x256xf32>
    %125 = vector.broadcast %49 : vector<4x1xf32> to vector<4x256xf32>
    %126 = arith.mulf %125, %121 : vector<4x256xf32>
    %127 = arith.addf %115, %126 : vector<4x256xf32>
    %128 = vector.broadcast %50 : vector<4x1xf32> to vector<4x256xf32>
    %129 = arith.mulf %128, %121 : vector<4x256xf32>
    %130 = arith.addf %118, %129 : vector<4x256xf32>
    %c0_27 = arith.constant 0 : index
    %c143 = arith.constant 143 : index
    %131 = vector.load %arg5[%c0_27, %c143] : memref<4x512xf32, #tpu.memory_space<vmem>>, vector<4x256xf32>
    %cst_28 = arith.constant 0.000000e+00 : f32
    %132 = vector.broadcast %cst_28 : f32 to vector<4x256xf32>
    %133 = arith.select %27, %131, %132 : vector<4x256xi1>, vector<4x256xf32>
    %134 = vector.broadcast %51 : vector<4x1xf32> to vector<4x256xf32>
    %135 = arith.mulf %134, %133 : vector<4x256xf32>
    %136 = arith.addf %124, %135 : vector<4x256xf32>
    %137 = vector.broadcast %52 : vector<4x1xf32> to vector<4x256xf32>
    %138 = arith.mulf %137, %133 : vector<4x256xf32>
    %139 = arith.addf %127, %138 : vector<4x256xf32>
    %140 = vector.broadcast %53 : vector<4x1xf32> to vector<4x256xf32>
    %141 = arith.mulf %140, %133 : vector<4x256xf32>
    %142 = arith.addf %130, %141 : vector<4x256xf32>
    %c0_29 = arith.constant 0 : index
    %c144 = arith.constant 144 : index
    %143 = vector.load %arg5[%c0_29, %c144] : memref<4x512xf32, #tpu.memory_space<vmem>>, vector<4x256xf32>
    %144 = vector.broadcast %54 : vector<4x1xf32> to vector<4x256xf32>
    %145 = arith.mulf %144, %143 : vector<4x256xf32>
    %146 = arith.addf %136, %145 : vector<4x256xf32>
    %147 = vector.broadcast %55 : vector<4x1xf32> to vector<4x256xf32>
    %148 = arith.mulf %147, %143 : vector<4x256xf32>
    %149 = arith.addf %139, %148 : vector<4x256xf32>
    %150 = vector.broadcast %56 : vector<4x1xf32> to vector<4x256xf32>
    %151 = arith.mulf %150, %143 : vector<4x256xf32>
    %152 = arith.addf %142, %151 : vector<4x256xf32>
    %c0_30 = arith.constant 0 : index
    %c145 = arith.constant 145 : index
    %153 = vector.load %arg5[%c0_30, %c145] : memref<4x512xf32, #tpu.memory_space<vmem>>, vector<4x256xf32>
    %cst_31 = arith.constant 0.000000e+00 : f32
    %154 = vector.broadcast %cst_31 : f32 to vector<4x256xf32>
    %155 = arith.select %31, %153, %154 : vector<4x256xi1>, vector<4x256xf32>
    %156 = vector.broadcast %57 : vector<4x1xf32> to vector<4x256xf32>
    %157 = arith.mulf %156, %155 : vector<4x256xf32>
    %158 = arith.addf %146, %157 : vector<4x256xf32>
    %159 = vector.broadcast %58 : vector<4x1xf32> to vector<4x256xf32>
    %160 = arith.mulf %159, %155 : vector<4x256xf32>
    %161 = arith.addf %149, %160 : vector<4x256xf32>
    %162 = vector.broadcast %59 : vector<4x1xf32> to vector<4x256xf32>
    %163 = arith.mulf %162, %155 : vector<4x256xf32>
    %164 = arith.addf %152, %163 : vector<4x256xf32>
    %cst_32 = arith.constant dense<0.000000e+00> : vector<256xf32>
    %165 = vector.multi_reduction <add>, %158, %cst_32 [0] : vector<4x256xf32> to vector<256xf32>
    %166 = vector.shape_cast %165 : vector<256xf32> to vector<1x256xf32>
    %c0_33 = arith.constant 0 : index
    %167 = memref.load %arg3[%c0_33] : memref<3xf32, #tpu.memory_space<smem>>
    %168 = vector.broadcast %167 : f32 to vector<1x256xf32>
    %169 = arith.addf %166, %168 : vector<1x256xf32>
    %c0_34 = arith.constant 0 : index
    %c0_35 = arith.constant 0 : index
    %c0_36 = arith.constant 0 : index
    %170 = vector.load %arg4[%c0_34, %c0_35, %c0_36] : memref<1x3x256xf32, #tpu.memory_space<vmem>>, vector<1x1x256xf32>
    %171 = vector.shape_cast %170 : vector<1x1x256xf32> to vector<1x256xf32>
    %172 = vector.shape_cast %169 : vector<1x256xf32> to vector<1x1x256xf32>
    tpu.vector_store %arg4[%c0_34, %c0_35, %c0_36], %172 {strides = array<i32>} : memref<1x3x256xf32, #tpu.memory_space<vmem>>, vector<1x1x256xf32>,
    %cst_37 = arith.constant dense<0.000000e+00> : vector<256xf32>
    %173 = vector.multi_reduction <add>, %161, %cst_37 [0] : vector<4x256xf32> to vector<256xf32>
    %174 = vector.shape_cast %173 : vector<256xf32> to vector<1x256xf32>
    %c1 = arith.constant 1 : index
    %175 = memref.load %arg3[%c1] : memref<3xf32, #tpu.memory_space<smem>>
    %176 = vector.broadcast %175 : f32 to vector<1x256xf32>
    %177 = arith.addf %174, %176 : vector<1x256xf32>
    %c0_38 = arith.constant 0 : index
    %c1_39 = arith.constant 1 : index
    %c0_40 = arith.constant 0 : index
    %178 = vector.load %arg4[%c0_38, %c1_39, %c0_40] : memref<1x3x256xf32, #tpu.memory_space<vmem>>, vector<1x1x256xf32>
    %179 = vector.shape_cast %178 : vector<1x1x256xf32> to vector<1x256xf32>
    %180 = vector.shape_cast %177 : vector<1x256xf32> to vector<1x1x256xf32>
    tpu.vector_store %arg4[%c0_38, %c1_39, %c0_40], %180 {strides = array<i32>} : memref<1x3x256xf32, #tpu.memory_space<vmem>>, vector<1x1x256xf32>,
    %cst_41 = arith.constant dense<0.000000e+00> : vector<256xf32>
    %181 = vector.multi_reduction <add>, %164, %cst_41 [0] : vector<4x256xf32> to vector<256xf32>
    %182 = vector.shape_cast %181 : vector<256xf32> to vector<1x256xf32>
    %c2 = arith.constant 2 : index
    %183 = memref.load %arg3[%c2] : memref<3xf32, #tpu.memory_space<smem>>
    %184 = vector.broadcast %183 : f32 to vector<1x256xf32>
    %185 = arith.addf %182, %184 : vector<1x256xf32>
    %c0_42 = arith.constant 0 : index
    %c2_43 = arith.constant 2 : index
    %c0_44 = arith.constant 0 : index
    %186 = vector.load %arg4[%c0_42, %c2_43, %c0_44] : memref<1x3x256xf32, #tpu.memory_space<vmem>>, vector<1x1x256xf32>
    %187 = vector.shape_cast %186 : vector<1x1x256xf32> to vector<1x256xf32>
    %188 = vector.shape_cast %185 : vector<1x256xf32> to vector<1x1x256xf32>
    tpu.vector_store %arg4[%c0_42, %c2_43, %c0_44], %188 {strides = array<i32>} : memref<1x3x256xf32, #tpu.memory_space<vmem>>, vector<1x1x256xf32>,
    return
  }
  func.func @transform_0(%arg0: i32) -> (i32, i32, i32) {
    %c0_i32 = arith.constant 0 : i32
    %c0_i32_0 = arith.constant 0 : i32
    %c0_i32_1 = arith.constant 0 : i32
    return %arg0, %c0_i32, %c0_i32_0 : i32, i32, i32
  }
  func.func @transform_1(%arg0: i32) -> (i32, i32) {
    %c0_i32 = arith.constant 0 : i32
    %c0_i32_0 = arith.constant 0 : i32
    %c0_i32_1 = arith.constant 0 : i32
    return %c0_i32, %c0_i32_0 : i32, i32
  }
  func.func @transform_2(%arg0: i32) -> i32 {
    %c0_i32 = arith.constant 0 : i32
    %c0_i32_0 = arith.constant 0 : i32
    return %c0_i32 : i32
  }
  func.func @transform_3(%arg0: i32) -> (i32, i32, i32) {
    %c0_i32 = arith.constant 0 : i32
    %c0_i32_0 = arith.constant 0 : i32
    %c0_i32_1 = arith.constant 0 : i32
    return %arg0, %c0_i32, %c0_i32_0 : i32, i32, i32
  }
}

</mosaic_0001>

<llo_original>
// kernel: tpu_custom_call.1
$region0: #{tpu_custom_call.1}
  #allocation0 [shape = 'u32[]', space=smem, size = 0x4, offset = 0x4, fixed_abs, tag = 'smem constant byte address 0x4 - core index']
  #allocation1 [shape = 'u32[72,128]{1,0:T(1,128)}', space=vmem, size = 0x9000, scoped, tag = 'internal scratch']
  #allocation2 [shape = 'f32[4,512]{1,0:T(4,128)}', space=vmem, size = 0x2000, scoped, tag = 'scratch operand']
  %s0 = inlined_call_operand.hbm [shape: f32[2,4,256], index: 0, kind: input, shape index: {}]
  %s1 = inlined_call_operand.hbm [shape: f32[4,27], index: 1, kind: input, shape index: {}]
  %s2 = inlined_call_operand.vmem [shape: f32[3], index: 2, kind: input, shape index: {}]
  %s3 = inlined_call_operand.vmem [shape: f32[2,3,256], index: 3, kind: output, shape index: {}]
  %s4 = sld [smem:[#allocation0]]
  $region57: #{tpu_custom_call.1} parent=0
    _
  %s6 = ssub.s32 1, %s4
  %s7 = scalar_select 0, %s6, %s4
  $region1: #{tpu_custom_call.1} parent=0
    #allocation3 [shape = 'u8[8192]{0}', space=vmem, size = 0x2000, scoped, tag = 'input window, operand 0']
    #allocation4 [shape = 's32[2]{0}', space=sflag, size = 0x8, scoped, tag = 'scoped memory for tpu_custom_call.1']
    #allocation5 [shape = 's32[2]{0}', space=sflag, size = 0x8, scoped, tag = 'scoped memory for tpu_custom_call.1']
    #allocation6 [shape = 'u8[2048]{0}', space=vmem, size = 0x800, scoped, tag = 'input window, operand 1, single buffered']
    #allocation7 [shape = 's32[1]{0}', space=sflag, size = 0x4, scoped, tag = 'scoped memory for tpu_custom_call.1']
    #allocation8 [shape = 'u8[512]{0}', space=smem, size = 0x200, scoped, tag = 'input window, operand 2, single buffered']
    %8 = vsyncpa [#allocation4], 0
    %s9 = scalar_lea.sflag [#allocation4], 1
    %10 = vsyncpa %s9, 0
    %11 = vsyncpa [#allocation7], 0
    %12 = vsyncpa [#allocation5], 0
    loop: start=0, step=1, limit=4
    $region2: #{tpu_custom_call.1} parent=1 // loop_pre_header
      _
    $region3: #{tpu_custom_call.1} parent=1 // loop_header
      %s14 = sphi 0, %s18
      %p15 = scmp.ge.s32.totalorder %s14, 4
      %s24 = sphi 0, %s26
      %s27 = sphi 0, %s24
      %s28 = sphi 0, %s27
      %s44 = sphi 0, %s28
      %s48 = sphi 0, %s48
      %s50 = sphi 0, %s48
      %s51 = sphi 0, %s50
      %s65 = sphi 0, %s51
      %s69 = sphi 0, %s69
      %s71 = sphi 0, %s69
      %s72 = sphi 0, %s71
      %s86 = sphi 0, %s72
      %s92 = sphi 0, %s94
      %s95 = sphi 0, %s92
      %s96 = sphi 0, %s95
      %s112 = sphi 0, %s96
    $region4: #{tpu_custom_call.1} parent=1 // loop_header_branch
      %17 = sbr.rel (%p15) target = $region8
    $region5: #{tpu_custom_call.1} parent=1 // loop_body
      %s19 = ssub.s32 %s14, 1
      %s20 = ssub.s32 %s14, 2
      %s21 = sadd.s32 %s14, 1
      %s22 = ssub.s32 %s14, %s21
      %p23 = scmp.eq.s32.totalorder %s22, 0
      %s25 = sadd.s32 %s24, 1
      %s26 = scalar_select %p23, %s24, %s25
      %p29 = pneg %p23
      %p30 = scmp.eq.s32.totalorder %s14, 1
      %p31 = por %p29, %p30
      %p32 = scmp.ne.s32.totalorder %s24, %s27
      %p33 = scmp.eq.s32.totalorder %s14, 0
      %p34 = por %p32, %p33
      %p35 = scmp.ne.s32.totalorder %s24, %s27
      %p36 = scmp.eq.s32.totalorder %s19, 1
      %p37 = por %p35, %p36
      %p38 = scmp.ne.s32.totalorder %s27, %s28
      %p39 = scmp.eq.s32.totalorder %s19, 0
      %p40 = por %p38, %p39
      %p41 = scmp.ne.s32.totalorder %s27, %s28
      %p42 = scmp.eq.s32.totalorder %s20, 1
      %p43 = por %p41, %p42
      %p45 = scmp.ne.s32.totalorder %s28, %s44
      %p46 = scmp.eq.s32.totalorder %s20, 0
      %p47 = por %p45, %p46
      %s49 = sadd.s32 %s48, 1
      %p52 = scmp.eq.s32.totalorder %s14, 1
      %p53 = scmp.ne.s32.totalorder %s48, %s50
      %p54 = scmp.eq.s32.totalorder %s14, 0
      %p55 = por %p53, %p54
      %p56 = scmp.ne.s32.totalorder %s48, %s50
      %p57 = scmp.eq.s32.totalorder %s19, 1
      %p58 = por %p56, %p57
      %p59 = scmp.ne.s32.totalorder %s50, %s51
      %p60 = scmp.eq.s32.totalorder %s19, 0
      %p61 = por %p59, %p60
      %p62 = scmp.ne.s32.totalorder %s50, %s51
      %p63 = scmp.eq.s32.totalorder %s20, 1
      %p64 = por %p62, %p63
      %p66 = scmp.ne.s32.totalorder %s51, %s65
      %p67 = scmp.eq.s32.totalorder %s20, 0
      %p68 = por %p66, %p67
      %s70 = sadd.s32 %s69, 1
      %p73 = scmp.eq.s32.totalorder %s14, 1
      %p74 = scmp.ne.s32.totalorder %s69, %s71
      %p75 = scmp.eq.s32.totalorder %s14, 0
      %p76 = por %p74, %p75
      %p77 = scmp.ne.s32.totalorder %s69, %s71
      %p78 = scmp.eq.s32.totalorder %s19, 1
      %p79 = por %p77, %p78
      %p80 = scmp.ne.s32.totalorder %s71, %s72
      %p81 = scmp.eq.s32.totalorder %s19, 0
      %p82 = por %p80, %p81
      %p83 = scmp.ne.s32.totalorder %s71, %s72
      %p84 = scmp.eq.s32.totalorder %s20, 1
      %p85 = por %p83, %p84
      %p87 = scmp.ne.s32.totalorder %s72, %s86
      %p88 = scmp.eq.s32.totalorder %s20, 0
      %p89 = por %p87, %p88
      %s90 = ssub.s32 %s14, %s21
      %p91 = scmp.eq.s32.totalorder %s90, 0
      %s93 = sadd.s32 %s92, 1
      %s94 = scalar_select %p91, %s92, %s93
      %p97 = pneg %p91
      %p98 = scmp.eq.s32.totalorder %s14, 1
      %p99 = por %p97, %p98
      %p100 = scmp.ne.s32.totalorder %s92, %s95
      %p101 = scmp.eq.s32.totalorder %s14, 0
      %p102 = por %p100, %p101
      %p103 = scmp.ne.s32.totalorder %s92, %s95
      %p104 = scmp.eq.s32.totalorder %s19, 1
      %p105 = por %p103, %p104
      %p106 = scmp.ne.s32.totalorder %s95, %s96
      %p107 = scmp.eq.s32.totalorder %s19, 0
      %p108 = por %p106, %p107
      %p109 = scmp.ne.s32.totalorder %s95, %s96
      %p110 = scmp.eq.s32.totalorder %s20, 1
      %p111 = por %p109, %p110
      %p113 = scmp.ne.s32.totalorder %s96, %s112
      %p114 = scmp.eq.s32.totalorder %s20, 0
      %p115 = por %p113, %p114
      %p116 = scmp.le.s32.totalorder 1, %s14
      %p117 = scmp.lt.s32.totalorder %s14, 3
      %p118 = pnand %p116, %p117
      %p119 = pneg %p118
      // Predicated region
      $region9: #{tpu_custom_call.1} parent=5 // pred_check
        _
      $region10: #{tpu_custom_call.1} parent=5 // pred_check_branch
        %121 = sbr.rel (%p118) target = $region12
      $region11: #{tpu_custom_call.1} parent=5 // pred_region
        %s122 = ssub.s32 %s14, 1
        // Predicated region
        $region13: #{tpu_custom_call.1} parent=11 // pred_check
          %p123 = pneg %p61
        $region14: #{tpu_custom_call.1} parent=11 // pred_check_branch
          %125 = sbr.rel (%p123) target = $region16
        $region15: #{tpu_custom_call.1} parent=11 // pred_region
          %127 = vsyncadd [#allocation7], 0
          %s129 = sshll.u32 %s1, 4
          %s130 = int_to_ptr.hbm [resolvable:$true] %s129
          %s131 = sshll.u32 [#allocation6], 4
          %s132 = int_to_ptr.vmem [resolvable:$true] %s131
          %134 = dma.hbm_to_vmem [thread:$0]  %s130, 64, %s132, [#allocation7]
        $region16: #{tpu_custom_call.1} parent=11 // pred_fallthru
          _
        // Predicated region
        $region17: #{tpu_custom_call.1} parent=11 // pred_check
          %p135 = pneg %p82
        $region18: #{tpu_custom_call.1} parent=11 // pred_check_branch
          %137 = sbr.rel (%p135) target = $region20
        $region19: #{tpu_custom_call.1} parent=11 // pred_region
          %139 = vsyncadd [#allocation5], 0
          %s141 = sshll.u32 %s2, 4
          %s142 = int_to_ptr.vmem [resolvable:$true] %s141
          %144 = dma.vmem_to_smem %s142, 16, [#allocation8], [#allocation5]
        $region20: #{tpu_custom_call.1} parent=11 // pred_fallthru
          _
      $region12: #{tpu_custom_call.1} parent=5 // pred_fallthru
        _
      %p145 = scmp.lt.s32.totalorder %s14, 2
      // Predicated region
      $region21: #{tpu_custom_call.1} parent=5 // pred_check
        %p146 = pneg %p145
      $region22: #{tpu_custom_call.1} parent=5 // pred_check_branch
        %148 = sbr.rel (%p146) target = $region24
      $region23: #{tpu_custom_call.1} parent=5 // pred_region
        // Predicated region
        $region25: #{tpu_custom_call.1} parent=23 // pred_check
          %p149 = pneg %p34
        $region26: #{tpu_custom_call.1} parent=23 // pred_check_branch
          %151 = sbr.rel (%p149) target = $region28
        $region27: #{tpu_custom_call.1} parent=23 // pred_region
          %s152 = sand.u32 %s24, 1
          %s153 = scalar_lea.sflag [#allocation4], %s152
          %s154 = sand.u32 %s24, 1
          %s155 = smul.addr %s154, 8
          %s156 = scalar_lea.vmem [#allocation3], %s155
          %158 = vsyncadd %s153, 0
          %s159 = smul.addr %s14, 2
          %s160 = smul.addr %s159, 4
          %s161 = scalar_lea.hbm %s0, %s160
          %s163 = sshll.u32 %s161, 4
          %s164 = int_to_ptr.hbm [resolvable:$true] %s163
          %s165 = sshll.u32 %s156, 4
          %s166 = int_to_ptr.vmem [resolvable:$true] %s165
          %168 = dma.hbm_to_vmem [thread:$0]  %s164, 128, %s166, %s153
        $region28: #{tpu_custom_call.1} parent=23 // pred_fallthru
          _
      $region24: #{tpu_custom_call.1} parent=5 // pred_fallthru
        _
      %p169 = scmp.le.s32.totalorder 1, %s14
      %p170 = scmp.lt.s32.totalorder %s14, 3
      %p171 = pnand %p169, %p170
      %p172 = pneg %p171
      // Predicated region
      $region29: #{tpu_custom_call.1} parent=5 // pred_check
        _
      $region30: #{tpu_custom_call.1} parent=5 // pred_check_branch
        %174 = sbr.rel (%p171) target = $region32
      $region31: #{tpu_custom_call.1} parent=5 // pred_region
        %s175 = ssub.s32 %s14, 1
        %s176 = sand.u32 %s27, 1
        %s177 = scalar_lea.sflag [#allocation4], %s176
        %s178 = sand.u32 %s27, 1
        %s179 = smul.addr %s178, 8
        %s180 = scalar_lea.vmem [#allocation3], %s179
        // Predicated region
        $region33: #{tpu_custom_call.1} parent=31 // pred_check
          %p181 = pneg %p40
        $region34: #{tpu_custom_call.1} parent=31 // pred_check_branch
          %183 = sbr.rel (%p181) target = $region36
        $region35: #{tpu_custom_call.1} parent=31 // pred_region
          %185 = dma.done %s177, 128
        $region36: #{tpu_custom_call.1} parent=31 // pred_fallthru
          _
        // Predicated region
        $region37: #{tpu_custom_call.1} parent=31 // pred_check
          %p186 = pneg %p61
        $region38: #{tpu_custom_call.1} parent=31 // pred_check_branch
          %188 = sbr.rel (%p186) target = $region40
        $region39: #{tpu_custom_call.1} parent=31 // pred_region
          %190 = dma.done [#allocation7], 64
        $region40: #{tpu_custom_call.1} parent=31 // pred_fallthru
          _
        // Predicated region
        $region41: #{tpu_custom_call.1} parent=31 // pred_check
          %p191 = pneg %p82
        $region42: #{tpu_custom_call.1} parent=31 // pred_check_branch
          %193 = sbr.rel (%p191) target = $region44
        $region43: #{tpu_custom_call.1} parent=31 // pred_region
          %195 = dma.done [#allocation5], 16
        $region44: #{tpu_custom_call.1} parent=31 // pred_fallthru
          _
        %196 = sfence
        %s197 = sand.u32 %s27, 1
        %s198 = scalar_lea.sflag [#allocation4], %s197
        %s199 = sand.u32 %s27, 1
        %s200 = smul.addr %s199, 8
        %s201 = scalar_lea.vmem [#allocation3], %s200
        %p202 = pneg %p40
        %p203 = pneg %p37
        %p204 = pneg %p61
        %p205 = pneg %p58
        %p206 = pneg %p82
        %p207 = pneg %p79
        %p208 = pneg %p108
        %p209 = pneg %p105
        %p210 = scmp.lt.s32.totalorder %s19, 1
        %s211 = scalar_select %p210, %s19, 1
        %s212 = smul.addr %s211, 2
        %s213 = smul.addr %s212, 4
        %s214 = scalar_lea.vmem %s3, %s213
        %p215 = scmp.lt.s32.totalorder %s19, 1
        %s216 = scalar_select %p215, %s19, 1
        %s217 = smul.addr %s216, 2
        %s218 = smul.addr %s217, 4
        %s219 = scalar_lea.vmem %s3, %s218
        %220 = vst [vmem:[#allocation2] sm:$0xf] 0.0
        %221 = vst [vmem:[#allocation2 + $0xc] sm:$0xf] 0.0
        %v222 = vld [vmem:[%s180] sm:$0xff]
        %223 = vst [vmem:[#allocation2 + $0x4] sm:$0xff] %v222
        %v224 = vlaneseq
        %v225 = vand.u32 %v224, 127
        %v226 = vadd.s32 %v225, 128
        %vm227 = vcmp.lt.s32.totalorder %v225, 0
        %v228 = vsub.s32 0, %v225
        %v229 = vsel %vm227, %v228, %v225
        %v230 = vshrl.u32 %v229, 4
        %v231 = vand.u32 %v229, 15
        %v232 = vsub.s32 0, %v231
        %v233 = vsel %vm227, %v232, %v231
        %vm234 = vcmp.lt.s32.totalorder %v226, 0
        %v235 = vsub.s32 0, %v226
        %v236 = vsel %vm234, %v235, %v226
        %v237 = vshrl.u32 %v236, 4
        %v238 = vand.u32 %v236, 15
        %v239 = vsub.s32 0, %v238
        %v240 = vsel %vm234, %v239, %v238
        %vm241 = vcmp.ne.s32.totalorder %v233, 0
        %vm242 = vcmp.ne.s32.totalorder %v240, 0
        %vm243 = vcmp.lt.s32.totalorder %v233, 0
        %vm244 = vcmp.lt.s32.totalorder %v240, 0
        %vm245 = vmand %vm243, %vm241
        %vm246 = vmand %vm244, %vm242
        %v247 = vadd.s32 %v233, 16
        %v248 = vadd.s32 %v240, 16
        %v249 = vsel %vm245, %v247, %v233
        %v250 = vsel %vm246, %v248, %v240
        %vm251 = vcmp.ge.s32.totalorder %v249, 1
        %vm252 = vcmp.ge.s32.totalorder %v250, 1
        %v253 = vsel %vm251, 1, 0
        %v254 = vsel %vm252, 1, 0
        %vm255 = vcmp.eq.s32.totalorder %v253, 1
        %vm256 = vcmp.eq.s32.totalorder %v254, 1
        %vm257 = vcmp.le.s32.totalorder %v249, 14
        %vm258 = vcmp.le.s32.totalorder %v250, 14
        %v259 = vsel %vm257, 1, 0
        %v260 = vsel %vm258, 1, 0
        %vm261 = vcmp.eq.s32.totalorder %v259, 1
        %vm262 = vcmp.eq.s32.totalorder %v260, 1
        %v263 = vld [vmem:[#allocation6] sm:$0xf]
        %v264 = vld [vmem:[#allocation2] sm:$0xff]
        %v265 = vld [vmem:[#allocation2 + $0x8] sm:$0xf]
        %268 = vst [vmem:[#allocation1] ss:$2 sm:$0xff] %v264
        %s269 = scalar_lea.vmem [#allocation1], 16
        %270 = vst [vmem:[%s269] ss:$2 sm:$0xff] %v265
        %v271 = vld.sshfl [vmem:[#allocation1] sm:$0xff pattern:$0x75316420]
        %v272 = vld.sshfl [vmem:[#allocation1 + $0x8] sm:$0xff pattern:$0x75316420]
        %v273 = vld.sshfl [vmem:[#allocation1 + $0x10] sm:$0xff pattern:$0x75316420]
        %274 = vrot.lane.b32.xlu0 %v271, 17
        %v275 = vpop.permute.xlu0 %274
        %276 = vrot.lane.b32.xlu0 %v272, 17
        %v277 = vpop.permute.xlu0 %276
        %278 = vrot.lane.b32.xlu0 %v273, 17
        %v279 = vpop.permute.xlu0 %278
        %vm280 = vcmask 138240
        %v281 = vsel %vm280, %v275, %v277
        %v282 = vsel %vm280, %v277, %v279
        %v285 = vsel %vm255, %v281, 0.0
        %v286 = vsel %vm256, %v282, 0.0
        %288 = vset.pattern.permute.xlu0 0
        %289 = vperm.xlu0 %288, %v263
        %v290 = vpop.permute.xlu0 %289
        %v292 = vmul.f32 %v290, %v285
        %v293 = vmul.f32 %v290, %v286
        %v294 = vadd.f32 %v292, 0.0
        %v295 = vadd.f32 %v293, 0.0
        %296 = vset.pattern.permute.xlu0 1
        %297 = vperm.xlu0 %296, %v263
        %v298 = vpop.permute.xlu0 %297
        %v300 = vmul.f32 %v298, %v285
        %v301 = vmul.f32 %v298, %v286
        %v302 = vadd.f32 %v300, 0.0
        %v303 = vadd.f32 %v301, 0.0
        %304 = vset.pattern.permute.xlu0 2
        %305 = vperm.xlu0 %304, %v263
        %v306 = vpop.permute.xlu0 %305
        %v308 = vmul.f32 %v306, %v285
        %v309 = vmul.f32 %v306, %v286
        %v310 = vadd.f32 %v308, 0.0
        %v311 = vadd.f32 %v309, 0.0
        %v312 = vld [vmem:[#allocation2] sm:$0xff]
        %v313 = vld [vmem:[#allocation2 + $0x8] sm:$0xf]
        %314 = vset.pattern.permute.xlu0 3
        %315 = vperm.xlu0 %314, %v263
        %v316 = vpop.permute.xlu0 %315
        %320 = vst [vmem:[#allocation1] ss:$2 sm:$0xff] %v312
        %s321 = scalar_lea.vmem [#allocation1], 16
        %322 = vst [vmem:[%s321] ss:$2 sm:$0xff] %v313
        %v323 = vld.sshfl [vmem:[#allocation1] sm:$0xff pattern:$0x75316420]
        %v324 = vld.sshfl [vmem:[#allocation1 + $0x8] sm:$0xff pattern:$0x75316420]
        %v325 = vld.sshfl [vmem:[#allocation1 + $0x10] sm:$0xff pattern:$0x75316420]
        %326 = vrot.lane.b32.xlu0 %v323, 16
        %v327 = vpop.permute.xlu0 %326
        %328 = vrot.lane.b32.xlu0 %v324, 16
        %v329 = vpop.permute.xlu0 %328
        %330 = vrot.lane.b32.xlu0 %v325, 16
        %v331 = vpop.permute.xlu0 %330
        %vm332 = vcmask 130048
        %v333 = vsel %vm332, %v327, %v329
        %v334 = vsel %vm332, %v329, %v331
        %v337 = vmul.f32 %v316, %v333
        %v338 = vmul.f32 %v316, %v334
        %v339 = vadd.f32 %v294, %v337
        %v340 = vadd.f32 %v295, %v338
        %341 = vset.pattern.permute.xlu0 4
        %342 = vperm.xlu0 %341, %v263
        %v343 = vpop.permute.xlu0 %342
        %345 = vst [vmem:[#allocation1] ss:$2 sm:$0xff] %v312
        %s346 = scalar_lea.vmem [#allocation1], 16
        %347 = vst [vmem:[%s346] ss:$2 sm:$0xff] %v313
        %v348 = vld.sshfl [vmem:[#allocation1] sm:$0xff pattern:$0x75316420]
        %v349 = vld.sshfl [vmem:[#allocation1 + $0x8] sm:$0xff pattern:$0x75316420]
        %v350 = vld.sshfl [vmem:[#allocation1 + $0x10] sm:$0xff pattern:$0x75316420]
        %351 = vrot.lane.b32.xlu0 %v348, 16
        %v352 = vpop.permute.xlu0 %351
        %353 = vrot.lane.b32.xlu0 %v349, 16
        %v354 = vpop.permute.xlu0 %353
        %355 = vrot.lane.b32.xlu0 %v350, 16
        %v356 = vpop.permute.xlu0 %355
        %v357 = vsel %vm332, %v352, %v354
        %v358 = vsel %vm332, %v354, %v356
        %v361 = vmul.f32 %v343, %v357
        %v362 = vmul.f32 %v343, %v358
        %v363 = vadd.f32 %v302, %v361
        %v364 = vadd.f32 %v303, %v362
        %365 = vset.pattern.permute.xlu0 5
        %366 = vperm.xlu0 %365, %v263
        %v367 = vpop.permute.xlu0 %366
        %369 = vst [vmem:[#allocation1] ss:$2 sm:$0xff] %v312
        %s370 = scalar_lea.vmem [#allocation1], 16
        %371 = vst [vmem:[%s370] ss:$2 sm:$0xff] %v313
        %v372 = vld.sshfl [vmem:[#allocation1] sm:$0xff pattern:$0x75316420]
        %v373 = vld.sshfl [vmem:[#allocation1 + $0x8] sm:$0xff pattern:$0x75316420]
        %v374 = vld.sshfl [vmem:[#allocation1 + $0x10] sm:$0xff pattern:$0x75316420]
        %375 = vrot.lane.b32.xlu0 %v372, 16
        %v376 = vpop.permute.xlu0 %375
        %377 = vrot.lane.b32.xlu0 %v373, 16
        %v378 = vpop.permute.xlu0 %377
        %379 = vrot.lane.b32.xlu0 %v374, 16
        %v380 = vpop.permute.xlu0 %379
        %v381 = vsel %vm332, %v376, %v378
        %v382 = vsel %vm332, %v378, %v380
        %v385 = vmul.f32 %v367, %v381
        %v386 = vmul.f32 %v367, %v382
        %v387 = vadd.f32 %v310, %v385
        %v388 = vadd.f32 %v311, %v386
        %v389 = vld [vmem:[#allocation2] sm:$0xff]
        %v390 = vld [vmem:[#allocation2 + $0x8] sm:$0xf]
        %393 = vst [vmem:[#allocation1] ss:$2 sm:$0xff] %v389
        %s394 = scalar_lea.vmem [#allocation1], 16
        %395 = vst [vmem:[%s394] ss:$2 sm:$0xff] %v390
        %v396 = vld.sshfl [vmem:[#allocation1] sm:$0xff pattern:$0x75316420]
        %v397 = vld.sshfl [vmem:[#allocation1 + $0x8] sm:$0xff pattern:$0x75316420]
        %v398 = vld.sshfl [vmem:[#allocation1 + $0x10] sm:$0xff pattern:$0x75316420]
        %399 = vrot.lane.b32.xlu0 %v396, 15
        %v400 = vpop.permute.xlu0 %399
        %401 = vrot.lane.b32.xlu0 %v397, 15
        %v402 = vpop.permute.xlu0 %401
        %403 = vrot.lane.b32.xlu0 %v398, 15
        %v404 = vpop.permute.xlu0 %403
        %vm405 = vcmask 121856
        %v406 = vsel %vm405, %v400, %v402
        %v407 = vsel %vm405, %v402, %v404
        %v410 = vsel %vm261, %v406, 0.0
        %v411 = vsel %vm262, %v407, 0.0
        %412 = vset.pattern.permute.xlu0 6
        %413 = vperm.xlu0 %412, %v263
        %v414 = vpop.permute.xlu0 %413
        %v416 = vmul.f32 %v414, %v410
        %v417 = vmul.f32 %v414, %v411
        %v418 = vadd.f32 %v339, %v416
        %v419 = vadd.f32 %v340, %v417
        %420 = vset.pattern.permute.xlu0 7
        %421 = vperm.xlu0 %420, %v263
        %v422 = vpop.permute.xlu0 %421
        %v424 = vmul.f32 %v422, %v410
        %v425 = vmul.f32 %v422, %v411
        %v426 = vadd.f32 %v363, %v424
        %v427 = vadd.f32 %v364, %v425
        %428 = vset.pattern.permute.xlu0 8
        %429 = vperm.xlu0 %428, %v263
        %v430 = vpop.permute.xlu0 %429
        %v432 = vmul.f32 %v430, %v410
        %v433 = vmul.f32 %v430, %v411
        %v434 = vadd.f32 %v387, %v432
        %v435 = vadd.f32 %v388, %v433
        %v436 = vld [vmem:[#allocation2] sm:$0xff]
        %v437 = vld [vmem:[#allocation2 + $0x8] sm:$0xf]
        %440 = vst [vmem:[#allocation1] ss:$2 sm:$0xff] %v436
        %s441 = scalar_lea.vmem [#allocation1], 16
        %442 = vst [vmem:[%s441] ss:$2 sm:$0xff] %v437
        %v443 = vld.sshfl [vmem:[#allocation1] sm:$0xff pattern:$0x75316420]
        %v444 = vld.sshfl [vmem:[#allocation1 + $0x8] sm:$0xff pattern:$0x75316420]
        %v445 = vld.sshfl [vmem:[#allocation1 + $0x10] sm:$0xff pattern:$0x75316420]
        %446 = vrot.lane.b32.xlu0 %v443, 1
        %v447 = vpop.permute.xlu0 %446
        %448 = vrot.lane.b32.xlu0 %v444, 1
        %v449 = vpop.permute.xlu0 %448
        %450 = vrot.lane.b32.xlu0 %v445, 1
        %v451 = vpop.permute.xlu0 %450
        %vm452 = vcmask 7168
        %v453 = vsel %vm452, %v447, %v449
        %v454 = vsel %vm452, %v449, %v451
        %v457 = vsel %vm255, %v453, 0.0
        %v458 = vsel %vm256, %v454, 0.0
        %459 = vset.pattern.permute.xlu0 9
        %460 = vperm.xlu0 %459, %v263
        %v461 = vpop.permute.xlu0 %460
        %v463 = vmul.f32 %v461, %v457
        %v464 = vmul.f32 %v461, %v458
        %v465 = vadd.f32 %v418, %v463
        %v466 = vadd.f32 %v419, %v464
        %467 = vset.pattern.permute.xlu0 10
        %468 = vperm.xlu0 %467, %v263
        %v469 = vpop.permute.xlu0 %468
        %v471 = vmul.f32 %v469, %v457
        %v472 = vmul.f32 %v469, %v458
        %v473 = vadd.f32 %v426, %v471
        %v474 = vadd.f32 %v427, %v472
        %475 = vset.pattern.permute.xlu0 11
        %476 = vperm.xlu0 %475, %v263
        %v477 = vpop.permute.xlu0 %476
        %v479 = vmul.f32 %v477, %v457
        %v480 = vmul.f32 %v477, %v458
        %v481 = vadd.f32 %v434, %v479
        %v482 = vadd.f32 %v435, %v480
        %v483 = vld [vmem:[#allocation2 + $0x4] sm:$0xff]
        %484 = vset.pattern.permute.xlu0 12
        %485 = vperm.xlu0 %484, %v263
        %v486 = vpop.permute.xlu0 %485
        %489 = vst [vmem:[#allocation1] ss:$2 sm:$0xff] %v483
        %v490 = vld.sshfl [vmem:[#allocation1] sm:$0xff pattern:$0x75316420]
        %v491 = vld.sshfl [vmem:[#allocation1 + $0x8] sm:$0xff pattern:$0x75316420]
        %v494 = vmul.f32 %v486, %v490
        %v495 = vmul.f32 %v486, %v491
        %v496 = vadd.f32 %v465, %v494
        %v497 = vadd.f32 %v466, %v495
        %498 = vset.pattern.permute.xlu0 13
        %499 = vperm.xlu0 %498, %v263
        %v500 = vpop.permute.xlu0 %499
        %502 = vst [vmem:[#allocation1] ss:$2 sm:$0xff] %v483
        %v503 = vld.sshfl [vmem:[#allocation1] sm:$0xff pattern:$0x75316420]
        %v504 = vld.sshfl [vmem:[#allocation1 + $0x8] sm:$0xff pattern:$0x75316420]
        %v507 = vmul.f32 %v500, %v503
        %v508 = vmul.f32 %v500, %v504
        %v509 = vadd.f32 %v473, %v507
        %v510 = vadd.f32 %v474, %v508
        %511 = vset.pattern.permute.xlu0 14
        %512 = vperm.xlu0 %511, %v263
        %v513 = vpop.permute.xlu0 %512
        %515 = vst [vmem:[#allocation1] ss:$2 sm:$0xff] %v483
        %v516 = vld.sshfl [vmem:[#allocation1] sm:$0xff pattern:$0x75316420]
        %v517 = vld.sshfl [vmem:[#allocation1 + $0x8] sm:$0xff pattern:$0x75316420]
        %v520 = vmul.f32 %v513, %v516
        %v521 = vmul.f32 %v513, %v517
        %v522 = vadd.f32 %v481, %v520
        %v523 = vadd.f32 %v482, %v521
        %v524 = vld [vmem:[#allocation2 + $0x4] sm:$0xff]
        %v525 = vld [vmem:[#allocation2 + $0xc] sm:$0xf]
        %528 = vst [vmem:[#allocation1] ss:$2 sm:$0xff] %v524
        %s529 = scalar_lea.vmem [#allocation1], 16
        %530 = vst [vmem:[%s529] ss:$2 sm:$0xff] %v525
        %v531 = vld.sshfl [vmem:[#allocation1] sm:$0xff pattern:$0x75316420]
        %v532 = vld.sshfl [vmem:[#allocation1 + $0x8] sm:$0xff pattern:$0x75316420]
        %v533 = vld.sshfl [vmem:[#allocation1 + $0x10] sm:$0xff pattern:$0x75316420]
        %534 = vrot.lane.b32.xlu0 %v531, 127
        %v535 = vpop.permute.xlu0 %534
        %536 = vrot.lane.b32.xlu0 %v532, 127
        %v537 = vpop.permute.xlu0 %536
        %538 = vrot.lane.b32.xlu0 %v533, 127
        %v539 = vpop.permute.xlu0 %538
        %vm540 = vcmask 1039360
        %v541 = vsel %vm540, %v535, %v537
        %v542 = vsel %vm540, %v537, %v539
        %v545 = vsel %vm261, %v541, 0.0
        %v546 = vsel %vm262, %v542, 0.0
        %547 = vset.pattern.permute.xlu0 15
        %548 = vperm.xlu0 %547, %v263
        %v549 = vpop.permute.xlu0 %548
        %v551 = vmul.f32 %v549, %v545
        %v552 = vmul.f32 %v549, %v546
        %v553 = vadd.f32 %v496, %v551
        %v554 = vadd.f32 %v497, %v552
        %555 = vset.pattern.permute.xlu0 16
        %556 = vperm.xlu0 %555, %v263
        %v557 = vpop.permute.xlu0 %556
        %v559 = vmul.f32 %v557, %v545
        %v560 = vmul.f32 %v557, %v546
        %v561 = vadd.f32 %v509, %v559
        %v562 = vadd.f32 %v510, %v560
        %563 = vset.pattern.permute.xlu0 17
        %564 = vperm.xlu0 %563, %v263
        %v565 = vpop.permute.xlu0 %564
        %v567 = vmul.f32 %v565, %v545
        %v568 = vmul.f32 %v565, %v546
        %v569 = vadd.f32 %v522, %v567
        %v570 = vadd.f32 %v523, %v568
        %v571 = vld [vmem:[#allocation2 + $0x4] sm:$0xff]
        %v572 = vld [vmem:[#allocation2 + $0xc] sm:$0xf]
        %575 = vst [vmem:[#allocation1] ss:$2 sm:$0xff] %v571
        %s576 = scalar_lea.vmem [#allocation1], 16
        %577 = vst [vmem:[%s576] ss:$2 sm:$0xff] %v572
        %v578 = vld.sshfl [vmem:[#allocation1] sm:$0xff pattern:$0x75316420]
        %v579 = vld.sshfl [vmem:[#allocation1 + $0x8] sm:$0xff pattern:$0x75316420]
        %v580 = vld.sshfl [vmem:[#allocation1 + $0x10] sm:$0xff pattern:$0x75316420]
        %581 = vrot.lane.b32.xlu0 %v578, 113
        %v582 = vpop.permute.xlu0 %581
        %583 = vrot.lane.b32.xlu0 %v579, 113
        %v584 = vpop.permute.xlu0 %583
        %585 = vrot.lane.b32.xlu0 %v580, 113
        %v586 = vpop.permute.xlu0 %585
        %vm587 = vcmask 924672
        %v588 = vsel %vm587, %v582, %v584
        %v589 = vsel %vm587, %v584, %v586
        %v592 = vsel %vm255, %v588, 0.0
        %v593 = vsel %vm256, %v589, 0.0
        %594 = vset.pattern.permute.xlu0 18
        %595 = vperm.xlu0 %594, %v263
        %v596 = vpop.permute.xlu0 %595
        %v598 = vmul.f32 %v596, %v592
        %v599 = vmul.f32 %v596, %v593
        %v600 = vadd.f32 %v553, %v598
        %v601 = vadd.f32 %v554, %v599
        %602 = vset.pattern.permute.xlu0 19
        %603 = vperm.xlu0 %602, %v263
        %v604 = vpop.permute.xlu0 %603
        %v606 = vmul.f32 %v604, %v592
        %v607 = vmul.f32 %v604, %v593
        %v608 = vadd.f32 %v561, %v606
        %v609 = vadd.f32 %v562, %v607
        %610 = vset.pattern.permute.xlu0 20
        %611 = vperm.xlu0 %610, %v263
        %v612 = vpop.permute.xlu0 %611
        %v614 = vmul.f32 %v612, %v592
        %v615 = vmul.f32 %v612, %v593
        %v616 = vadd.f32 %v569, %v614
        %v617 = vadd.f32 %v570, %v615
        %v618 = vld [vmem:[#allocation2 + $0x4] sm:$0xff]
        %v619 = vld [vmem:[#allocation2 + $0xc] sm:$0xf]
        %620 = vset.pattern.permute.xlu0 21
        %621 = vperm.xlu0 %620, %v263
        %v622 = vpop.permute.xlu0 %621
        %626 = vst [vmem:[#allocation1] ss:$2 sm:$0xff] %v618
        %s627 = scalar_lea.vmem [#allocation1], 16
        %628 = vst [vmem:[%s627] ss:$2 sm:$0xff] %v619
        %v629 = vld.sshfl [vmem:[#allocation1] sm:$0xff pattern:$0x75316420]
        %v630 = vld.sshfl [vmem:[#allocation1 + $0x8] sm:$0xff pattern:$0x75316420]
        %v631 = vld.sshfl [vmem:[#allocation1 + $0x10] sm:$0xff pattern:$0x75316420]
        %632 = vrot.lane.b32.xlu0 %v629, 112
        %v633 = vpop.permute.xlu0 %632
        %634 = vrot.lane.b32.xlu0 %v630, 112
        %v635 = vpop.permute.xlu0 %634
        %636 = vrot.lane.b32.xlu0 %v631, 112
        %v637 = vpop.permute.xlu0 %636
        %vm638 = vcmask 916480
        %v639 = vsel %vm638, %v633, %v635
        %v640 = vsel %vm638, %v635, %v637
        %v643 = vmul.f32 %v622, %v639
        %v644 = vmul.f32 %v622, %v640
        %v645 = vadd.f32 %v600, %v643
        %v646 = vadd.f32 %v601, %v644
        %647 = vset.pattern.permute.xlu0 22
        %648 = vperm.xlu0 %647, %v263
        %v649 = vpop.permute.xlu0 %648
        %651 = vst [vmem:[#allocation1] ss:$2 sm:$0xff] %v618
        %s652 = scalar_lea.vmem [#allocation1], 16
        %653 = vst [vmem:[%s652] ss:$2 sm:$0xff] %v619
        %v654 = vld.sshfl [vmem:[#allocation1] sm:$0xff pattern:$0x75316420]
        %v655 = vld.sshfl [vmem:[#allocation1 + $0x8] sm:$0xff pattern:$0x75316420]
        %v656 = vld.sshfl [vmem:[#allocation1 + $0x10] sm:$0xff pattern:$0x75316420]
        %657 = vrot.lane.b32.xlu0 %v654, 112
        %v658 = vpop.permute.xlu0 %657
        %659 = vrot.lane.b32.xlu0 %v655, 112
        %v660 = vpop.permute.xlu0 %659
        %661 = vrot.lane.b32.xlu0 %v656, 112
        %v662 = vpop.permute.xlu0 %661
        %v663 = vsel %vm638, %v658, %v660
        %v664 = vsel %vm638, %v660, %v662
        %v667 = vmul.f32 %v649, %v663
        %v668 = vmul.f32 %v649, %v664
        %v669 = vadd.f32 %v608, %v667
        %v670 = vadd.f32 %v609, %v668
        %671 = vset.pattern.permute.xlu0 23
        %672 = vperm.xlu0 %671, %v263
        %v673 = vpop.permute.xlu0 %672
        %675 = vst [vmem:[#allocation1] ss:$2 sm:$0xff] %v618
        %s676 = scalar_lea.vmem [#allocation1], 16
        %677 = vst [vmem:[%s676] ss:$2 sm:$0xff] %v619
        %v678 = vld.sshfl [vmem:[#allocation1] sm:$0xff pattern:$0x75316420]
        %v679 = vld.sshfl [vmem:[#allocation1 + $0x8] sm:$0xff pattern:$0x75316420]
        %v680 = vld.sshfl [vmem:[#allocation1 + $0x10] sm:$0xff pattern:$0x75316420]
        %681 = vrot.lane.b32.xlu0 %v678, 112
        %v682 = vpop.permute.xlu0 %681
        %683 = vrot.lane.b32.xlu0 %v679, 112
        %v684 = vpop.permute.xlu0 %683
        %685 = vrot.lane.b32.xlu0 %v680, 112
        %v686 = vpop.permute.xlu0 %685
        %v687 = vsel %vm638, %v682, %v684
        %v688 = vsel %vm638, %v684, %v686
        %v691 = vmul.f32 %v673, %v687
        %v692 = vmul.f32 %v673, %v688
        %v693 = vadd.f32 %v616, %v691
        %v694 = vadd.f32 %v617, %v692
        %v695 = vld [vmem:[#allocation2 + $0x4] sm:$0xff]
        %v696 = vld [vmem:[#allocation2 + $0xc] sm:$0xf]
        %699 = vst [vmem:[#allocation1] ss:$2 sm:$0xff] %v695
        %s700 = scalar_lea.vmem [#allocation1], 16
        %701 = vst [vmem:[%s700] ss:$2 sm:$0xff] %v696
        %v702 = vld.sshfl [vmem:[#allocation1] sm:$0xff pattern:$0x75316420]
        %v703 = vld.sshfl [vmem:[#allocation1 + $0x8] sm:$0xff pattern:$0x75316420]
        %v704 = vld.sshfl [vmem:[#allocation1 + $0x10] sm:$0xff pattern:$0x75316420]
        %705 = vrot.lane.b32.xlu0 %v702, 111
        %v706 = vpop.permute.xlu0 %705
        %707 = vrot.lane.b32.xlu0 %v703, 111
        %v708 = vpop.permute.xlu0 %707
        %709 = vrot.lane.b32.xlu0 %v704, 111
        %v710 = vpop.permute.xlu0 %709
        %vm711 = vcmask 908288
        %v712 = vsel %vm711, %v706, %v708
        %v713 = vsel %vm711, %v708, %v710
        %v716 = vsel %vm261, %v712, 0.0
        %v717 = vsel %vm262, %v713, 0.0
        %718 = vset.pattern.permute.xlu0 24
        %719 = vperm.xlu0 %718, %v263
        %v720 = vpop.permute.xlu0 %719
        %v722 = vmul.f32 %v720, %v716
        %v723 = vmul.f32 %v720, %v717
        %v724 = vadd.f32 %v645, %v722
        %v725 = vadd.f32 %v646, %v723
        %726 = vset.pattern.permute.xlu0 25
        %727 = vperm.xlu0 %726, %v263
        %v728 = vpop.permute.xlu0 %727
        %v730 = vmul.f32 %v728, %v716
        %v731 = vmul.f32 %v728, %v717
        %v732 = vadd.f32 %v669, %v730
        %v733 = vadd.f32 %v670, %v731
        %734 = vset.pattern.permute.xlu0 26
        %735 = vperm.xlu0 %734, %v263
        %v736 = vpop.permute.xlu0 %735
        %v738 = vmul.f32 %v736, %v716
        %v739 = vmul.f32 %v736, %v717
        %v740 = vadd.f32 %v693, %v738
        %v741 = vadd.f32 %v694, %v739
        %vm742 = vcmask 1043456
        %v743 = vsel %vm742, %v724, 0.0
        %v744 = vrot.slane %v743, 4
        %v745 = vadd.f32 %v743, %v744
        %v746 = vrot.slane %v745, 2
        %v747 = vadd.f32 %v745, %v746
        %v748 = vrot.slane %v747, 1
        %v749 = vadd.f32 %v747, %v748
        %v750 = vsel %vm742, %v725, 0.0
        %v751 = vrot.slane %v750, 4
        %v752 = vadd.f32 %v750, %v751
        %v753 = vrot.slane %v752, 2
        %v754 = vadd.f32 %v752, %v753
        %v755 = vrot.slane %v754, 1
        %v756 = vadd.f32 %v754, %v755
        %s757 = sld [smem:[#allocation8]]
        %v758 = vstv %s757
        %v759 = vadd.f32 %v749, %v758
        %v760 = vadd.f32 %v756, %v758
        %v763 = vrot.slane %v760, 7
        %vm764 = vcmask 1040384
        %v765 = vsel %vm764, %v759, %v763
        %v767 = vlaneseq
        %vm768 = vcmp.ge.s32.totalorder %v767, 0
        %vm769 = vcmp.lt.s32.totalorder %v767, 256
        %vm770 = vmand %vm768, %vm769
        %771 = vst.msk [vmem:[%s219] ss:$4 sm:$0x3] %vm770, %v765
        %v772 = vsel %vm742, %v732, 0.0
        %v773 = vrot.slane %v772, 4
        %v774 = vadd.f32 %v772, %v773
        %v775 = vrot.slane %v774, 2
        %v776 = vadd.f32 %v774, %v775
        %v777 = vrot.slane %v776, 1
        %v778 = vadd.f32 %v776, %v777
        %v779 = vsel %vm742, %v733, 0.0
        %v780 = vrot.slane %v779, 4
        %v781 = vadd.f32 %v779, %v780
        %v782 = vrot.slane %v781, 2
        %v783 = vadd.f32 %v781, %v782
        %v784 = vrot.slane %v783, 1
        %v785 = vadd.f32 %v783, %v784
        %s786 = sld [smem:[#allocation8 + $0x1]]
        %v787 = vstv %s786
        %v788 = vadd.f32 %v778, %v787
        %v789 = vadd.f32 %v785, %v787
        %v792 = vrot.slane %v789, 7
        %v793 = vsel %vm764, %v788, %v792
        %s795 = scalar_lea.vmem %s219, 1
        %796 = vst.msk [vmem:[%s795] ss:$4 sm:$0x3] %vm770, %v793
        %v797 = vsel %vm742, %v740, 0.0
        %v798 = vrot.slane %v797, 4
        %v799 = vadd.f32 %v797, %v798
        %v800 = vrot.slane %v799, 2
        %v801 = vadd.f32 %v799, %v800
        %v802 = vrot.slane %v801, 1
        %v803 = vadd.f32 %v801, %v802
        %v804 = vsel %vm742, %v741, 0.0
        %v805 = vrot.slane %v804, 4
        %v806 = vadd.f32 %v804, %v805
        %v807 = vrot.slane %v806, 2
        %v808 = vadd.f32 %v806, %v807
        %v809 = vrot.slane %v808, 1
        %v810 = vadd.f32 %v808, %v809
        %s811 = sld [smem:[#allocation8 + $0x2]]
        %v812 = vstv %s811
        %v813 = vadd.f32 %v803, %v812
        %v814 = vadd.f32 %v810, %v812
        %v817 = vrot.slane %v814, 7
        %v818 = vsel %vm764, %v813, %v817
        %s820 = scalar_lea.vmem %s219, 2
        %821 = vst.msk [vmem:[%s820] ss:$4 sm:$0x3] %vm770, %v818
        %p822 = scmp.lt.s32.totalorder %s19, 1
        %s823 = scalar_select %p822, %s19, 1
        %s824 = smul.addr %s823, 2
        %s825 = smul.addr %s824, 4
        %s826 = scalar_lea.vmem %s3, %s825
        // Predicated region
        $region45: #{tpu_custom_call.1} parent=31 // pred_check
          %p827 = pneg %p105
        $region46: #{tpu_custom_call.1} parent=31 // pred_check_branch
          %829 = sbr.rel (%p827) target = $region48
        $region47: #{tpu_custom_call.1} parent=31 // pred_region
          _
        $region48: #{tpu_custom_call.1} parent=31 // pred_fallthru
          _
      $region32: #{tpu_custom_call.1} parent=5 // pred_fallthru
        _
      %p830 = scmp.le.s32.totalorder 2, %s14
      // Predicated region
      $region49: #{tpu_custom_call.1} parent=5 // pred_check
        %p831 = pneg %p830
      $region50: #{tpu_custom_call.1} parent=5 // pred_check_branch
        %833 = sbr.rel (%p831) target = $region52
      $region51: #{tpu_custom_call.1} parent=5 // pred_region
        %s834 = ssub.s32 %s14, 2
        // Predicated region
        $region53: #{tpu_custom_call.1} parent=51 // pred_check
          %p835 = pneg %p111
        $region54: #{tpu_custom_call.1} parent=51 // pred_check_branch
          %837 = sbr.rel (%p835) target = $region56
        $region55: #{tpu_custom_call.1} parent=51 // pred_region
          %p838 = scmp.lt.s32.totalorder %s20, 1
          %s839 = scalar_select %p838, %s20, 1
          %s840 = smul.addr %s839, 2
          %s841 = smul.addr %s840, 4
          %s842 = scalar_lea.vmem %s3, %s841
        $region56: #{tpu_custom_call.1} parent=51 // pred_fallthru
          _
      $region52: #{tpu_custom_call.1} parent=5 // pred_fallthru
        _
    $region6: #{tpu_custom_call.1} parent=1 // loop_footer
      %s18 = sadd.s32 1, %s14
    $region7: #{tpu_custom_call.1} parent=1 // loop_footer_branch
      %13 = sbr.rel target = $region3
    $region8: #{tpu_custom_call.1} parent=1 // loop_exit
      _
    %843 = vsyncpa [#allocation4], 1
    %s844 = scalar_lea.sflag [#allocation4], 1
    %845 = vsyncpa %s844, 1
    %846 = vsyncpa [#allocation7], 1
    %847 = vsyncpa [#allocation5], 1
    %s848 = scalar_lea.sflag [#allocation5], 1
    %849 = vsyncpa %s848, 1

</llo_original>
